<compile_context>
chip_gen: v5e
topology: v5e:2x2
jax: 0.10.0
libtpu: 0.0.40
codegen_flags: <defaults>
</compile_context>

<pallas_src>
import jax
import jax.numpy as jnp
from jax.experimental import pallas as pl
from jax.experimental.pallas import tpu as pltpu


def _add_kernel(a_ref, b_ref, o_ref):
    # Elementwise add on the current VMEM tile (VPU).
    o_ref[...] = a_ref[...] + b_ref[...]


def _round_up(x: int, m: int) -> int:
    return ((x + m - 1) // m) * m


def pallas_add(a: jax.Array, b: jax.Array) -> jax.Array:
    assert a.shape == b.shape and a.dtype == b.dtype
    orig_shape = a.shape
    n = a.size
    itemsize = jnp.dtype(a.dtype).itemsize

    # dtype-specific sublane multiple: f32 -> 8, bf16 -> 16, int8/fp8 -> 32.
    sublane_mult = max(8, 32 // itemsize)

    # Lane-dense slab: prefer the widest lane multiple that divides numel
    # (free metadata-only reshape for contiguous inputs); ragged sizes pad by
    # fewer than `lanes` elements.
    lanes = 128
    for cand in (512, 256):
        if n % cand == 0:
            lanes = cand
            break

    n_pad = pl.cdiv(n, lanes) * lanes
    a_flat = a.reshape(-1)
    b_flat = b.reshape(-1)
    if n_pad != n:
        a_flat = jnp.pad(a_flat, (0, n_pad - n))
        b_flat = jnp.pad(b_flat, (0, n_pad - n))
    rows = n_pad // lanes
    a2 = a_flat.reshape(rows, lanes)
    b2 = b_flat.reshape(rows, lanes)

    bytes_per_row = lanes * itemsize
    total_bytes = rows * bytes_per_row          # per operand

    SMALL_BYTES = 512 * 1024                    # below this: single VMEM block
    TILE_CAP_BYTES = (5 * (1 << 20)) // 2       # 2.5 MiB / operand / step (v5e safe)

    grid = 1
    tile_rows = rows
    if total_bytes > SMALL_BYTES and rows > sublane_mult:
        # Smallest even grid count whose per-step tile fits the VMEM cap, then
        # equal-size (balanced) tiles rounded to the sublane multiple.
        g = 2
        while pl.cdiv(rows, g) * bytes_per_row > TILE_CAP_BYTES:
            g += 2
        tile_rows = min(_round_up(pl.cdiv(rows, g), sublane_mult),
                        _round_up(rows, sublane_mult))
        grid = pl.cdiv(rows, tile_rows)

    out_shape = jax.ShapeDtypeStruct((rows, lanes), a.dtype)

    if grid == 1:
        # Launch-overhead-dominated regime: one full-array VMEM block, no
        # pipeline machinery.
        out2 = pl.pallas_call(
            _add_kernel,
            out_shape=out_shape,
        )(a2, b2)
    else:
        out2 = pl.pallas_call(
            _add_kernel,
            out_shape=out_shape,
            grid_spec=pl.GridSpec(
                grid=(grid,),
                in_specs=[
                    pl.BlockSpec((tile_rows, lanes), lambda i: (i, 0)),
                    pl.BlockSpec((tile_rows, lanes), lambda i: (i, 0)),
                ],
                out_specs=pl.BlockSpec((tile_rows, lanes), lambda i: (i, 0)),
            ),
            compiler_params=pltpu.CompilerParams(
                # Pure streaming add: every grid step independent -> shard
                # across both TensorCores on v7x.
                dimension_semantics=("parallel",),
            ),
        )(a2, b2)

    out_flat = out2.reshape(-1)
    if n_pad != n:
        out_flat = out_flat[:n]
    return out_flat.reshape(orig_shape)


if __name__ == "__main__":
    key = jax.random.PRNGKey(0)
    k1, k2 = jax.random.split(key)

    # Small NCHW shape consistent with the module's elementwise add
    # (exercises the single-block path).
    x119_s = jax.random.normal(k1, (2, 4, 16, 16), dtype=jnp.float32)
    x133_s = jax.random.normal(k2, (2, 4, 16, 16), dtype=jnp.float32)
    out_s = jax.block_until_ready(pallas_add(x119_s, x133_s))
    ref_s = x119_s + x133_s
    assert out_s.shape == ref_s.shape
    assert jnp.allclose(out_s, ref_s, atol=1e-6, rtol=1e-6)

    # The module's actual shape (1, 1056, 28, 28) -- exercises the balanced
    # 2-step pipelined path ((rows, 512) slab, ~1.67 MiB tiles).
    k3, k4 = jax.random.split(k2)
    x119 = jax.random.normal(k3, (1, 1056, 28, 28), dtype=jnp.float32)
    x133 = jax.random.normal(k4, (1, 1056, 28, 28), dtype=jnp.float32)
    out = jax.block_until_ready(pallas_add(x119, x133))
    ref = x119 + x133
    assert out.shape == ref.shape
    assert jnp.allclose(out, ref, atol=1e-6, rtol=1e-6)

    print("KERNEL_OK")
</pallas_src>

<mosaic_0001>
module attributes {stable_mosaic.version = 11 : i64} {
  func.func @_add_kernel(%arg0: memref<4x512xf32, #tpu.memory_space<vmem>>, %arg1: memref<4x512xf32, #tpu.memory_space<vmem>>, %arg2: memref<4x512xf32, #tpu.memory_space<vmem>>) attributes {dimension_semantics = [], scalar_prefetch = 0 : i64, scratch_operands = 0 : i64, tpu.core_type = #tpu.core_type<tc>} {
    %c0 = arith.constant 0 : index
    %c0_0 = arith.constant 0 : index
    %0 = vector.load %arg0[%c0, %c0_0] : memref<4x512xf32, #tpu.memory_space<vmem>>, vector<4x512xf32>
    %c0_1 = arith.constant 0 : index
    %c0_2 = arith.constant 0 : index
    %1 = vector.load %arg1[%c0_1, %c0_2] : memref<4x512xf32, #tpu.memory_space<vmem>>, vector<4x512xf32>
    %2 = arith.addf %0, %1 : vector<4x512xf32>
    %c0_3 = arith.constant 0 : index
    %c0_4 = arith.constant 0 : index
    %3 = vector.load %arg2[%c0_3, %c0_4] : memref<4x512xf32, #tpu.memory_space<vmem>>, vector<4x512xf32>
    tpu.vector_store %arg2[%c0_3, %c0_4], %2 {strides = array<i32>} : memref<4x512xf32, #tpu.memory_space<vmem>>, vector<4x512xf32>,
    return
  }
}

</mosaic_0001>

<llo_original>
// kernel: tpu_custom_call.1
$region0: #{tpu_custom_call.1}
  #allocation0 [shape = 'u32[]', space=smem, size = 0x4, offset = 0x4, fixed_abs, tag = 'smem constant byte address 0x4 - core index']
  #allocation1 [shape = 'u32[72,128]{1,0:T(1,128)}', space=vmem, size = 0x9000, scoped, tag = 'internal scratch']
  %s0 = inlined_call_operand.hbm [shape: f32[4,512], index: 0, kind: input, shape index: {}]
  %s1 = inlined_call_operand.hbm [shape: f32[4,512], index: 1, kind: input, shape index: {}]
  %s2 = inlined_call_operand.hbm [shape: f32[4,512], index: 2, kind: output, shape index: {}]
  %s3 = sld [smem:[#allocation0]]
  $region26: #{tpu_custom_call.1} parent=0
    _
  %s5 = ssub.s32 1, %s3
  %s6 = scalar_select 0, %s5, %s3
  $region1: #{tpu_custom_call.1} parent=0
    #allocation2 [shape = 'u8[8192]{0}', space=vmem, size = 0x2000, scoped, tag = 'input window, operand 0, single buffered']
    #allocation3 [shape = 's32[1]{0}', space=sflag, size = 0x4, scoped, tag = 'scoped memory for tpu_custom_call.1']
    #allocation4 [shape = 's32[1]{0}', space=sflag, size = 0x4, scoped, tag = 'scoped memory for tpu_custom_call.1']
    #allocation5 [shape = 'u8[8192]{0}', space=vmem, size = 0x2000, scoped, tag = 'input window, operand 1, single buffered']
    #allocation6 [shape = 's32[1]{0}', space=sflag, size = 0x4, scoped, tag = 'scoped memory for tpu_custom_call.1']
    #allocation7 [shape = 'u8[8192]{0}', space=vmem, size = 0x2000, scoped, tag = 'output window, operand 0, single buffered']
    %7 = vsyncpa [#allocation3], 0
    %8 = vsyncpa [#allocation6], 0
    %9 = vsyncpa [#allocation4], 0
    // Predicated region
    $region2: #{tpu_custom_call.1} parent=1 // pred_check
      _
    $region3: #{tpu_custom_call.1} parent=1 // pred_check_branch
      %11 = sbr.rel (0) target = $region5
    $region4: #{tpu_custom_call.1} parent=1 // pred_region
      %13 = vsyncadd [#allocation3], 0
      %s15 = sshll.u32 %s0, 4
      %s16 = int_to_ptr.hbm [resolvable:$true] %s15
      %s17 = sshll.u32 [#allocation2], 4
      %s18 = int_to_ptr.vmem [resolvable:$true] %s17
      %20 = dma.hbm_to_vmem [thread:$0]  %s16, 256, %s18, [#allocation3]
    $region5: #{tpu_custom_call.1} parent=1 // pred_fallthru
      _
    // Predicated region
    $region6: #{tpu_custom_call.1} parent=1 // pred_check
      _
    $region7: #{tpu_custom_call.1} parent=1 // pred_check_branch
      %22 = sbr.rel (0) target = $region9
    $region8: #{tpu_custom_call.1} parent=1 // pred_region
      %24 = vsyncadd [#allocation6], 0
      %s26 = sshll.u32 %s1, 4
      %s27 = int_to_ptr.hbm [resolvable:$true] %s26
      %s28 = sshll.u32 [#allocation5], 4
      %s29 = int_to_ptr.vmem [resolvable:$true] %s28
      %31 = dma.hbm_to_vmem [thread:$0]  %s27, 256, %s29, [#allocation6]
    $region9: #{tpu_custom_call.1} parent=1 // pred_fallthru
      _
    // Predicated region
    $region10: #{tpu_custom_call.1} parent=1 // pred_check
      _
    $region11: #{tpu_custom_call.1} parent=1 // pred_check_branch
      %33 = sbr.rel (0) target = $region13
    $region12: #{tpu_custom_call.1} parent=1 // pred_region
      %35 = dma.done [#allocation3], 256
    $region13: #{tpu_custom_call.1} parent=1 // pred_fallthru
      _
    // Predicated region
    $region14: #{tpu_custom_call.1} parent=1 // pred_check
      _
    $region15: #{tpu_custom_call.1} parent=1 // pred_check_branch
      %37 = sbr.rel (0) target = $region17
    $region16: #{tpu_custom_call.1} parent=1 // pred_region
      %39 = dma.done [#allocation6], 256
    $region17: #{tpu_custom_call.1} parent=1 // pred_fallthru
      _
    %v40 = vld [vmem:[#allocation2] sm:$0xff]
    %v41 = vld [vmem:[#allocation2 + $0x8] sm:$0xff]
    %v42 = vld [vmem:[#allocation5] sm:$0xff]
    %v43 = vld [vmem:[#allocation5 + $0x8] sm:$0xff]
    %v44 = vadd.f32 %v40, %v42
    %v45 = vadd.f32 %v41, %v43
    %46 = vst [vmem:[#allocation7] sm:$0xff] %v44
    %47 = vst [vmem:[#allocation7 + $0x8] sm:$0xff] %v45
    // Predicated region
    $region18: #{tpu_custom_call.1} parent=1 // pred_check
      _
    $region19: #{tpu_custom_call.1} parent=1 // pred_check_branch
      %49 = sbr.rel (0) target = $region21
    $region20: #{tpu_custom_call.1} parent=1 // pred_region
      %51 = vsyncadd [#allocation4], 0
      %s53 = sshll.u32 [#allocation7], 4
      %s54 = int_to_ptr.vmem [resolvable:$true] %s53
      %s55 = sshll.u32 %s2, 4
      %s56 = int_to_ptr.hbm [resolvable:$true] %s55
      %58 = dma.vmem_to_hbm [thread:$0]  %s54, 256, %s56, [#allocation4]
    $region21: #{tpu_custom_call.1} parent=1 // pred_fallthru
      _
    // Predicated region
    $region22: #{tpu_custom_call.1} parent=1 // pred_check
      _
    $region23: #{tpu_custom_call.1} parent=1 // pred_check_branch
      %60 = sbr.rel (0) target = $region25
    $region24: #{tpu_custom_call.1} parent=1 // pred_region
      %62 = dma.done [#allocation4], 256
    $region25: #{tpu_custom_call.1} parent=1 // pred_fallthru
      _
    %63 = vsyncpa [#allocation3], 1
    %64 = vsyncpa [#allocation6], 1
    %65 = vsyncpa [#allocation4], 1

</llo_original>
